<compile_context>
chip_gen: v5e
topology: v5e:2x2
jax: 0.10.0
libtpu: 0.0.40
codegen_flags: <defaults>
</compile_context>

<pallas_src>
import jax
import jax.numpy as jnp
from jax.experimental import pallas as pl
from jax.experimental.pallas import tpu as pltpu

B_INIT = -0.2   # constant bias init used by the original module's _set_init
LANE = 128      # TPU lane width; pad feature dims to this


def _round_up(n, m):
    return ((n + m - 1) // m) * m


# ----------------------------------------------------------------------------- kernel
def _mlp_kernel(x_ref, *refs):
    """Whole MLP forward for one batch tile, entirely in VMEM.

    refs = (w0, b0, w1, b1, ..., w_pred, b_pred, out_ref)
    Matmul operands are bf16 (native MXU path) with f32 accumulation; bias-add and
    ReLU stay in f32 (mandatory on v5e — no bf16 VALU; cheap everywhere).
    """
    out_ref = refs[-1]
    params = refs[:-1]
    n_hidden = len(params) // 2 - 1

    h = x_ref[...]  # bf16 tile [tile_b, in_pad]
    for i in range(n_hidden):
        w = params[2 * i][...]          # bf16 [in_pad, hid_pad]
        b = params[2 * i + 1][...]      # f32  [1, hid_pad]
        acc = jnp.dot(h, w, preferred_element_type=jnp.float32) + b
        acc = jnp.maximum(acc, 0.0)     # ReLU in f32
        h = acc.astype(jnp.bfloat16)    # next matmul wants bf16 operands

    w_p = params[-2][...]
    b_p = params[-1][...]
    out = jnp.dot(h, w_p, preferred_element_type=jnp.float32) + b_p
    # Lane-dense (tile_b, 128k) unmasked store.  (Could be bf16 to halve writeback;
    # kept f32 to preserve the module's output precision.)
    out_ref[...] = out.astype(out_ref.dtype)


# ------------------------------------------------------------------- one-time packing
def pack_params(weights, biases):
    """Pad feature dims to multiples of 128 and cast weights to bf16 — ONCE.

    weights: list of [in_i, out_i] float32 (hidden layers ..., predict)
    biases:  list of [1, out_i] (or [out_i]) float32
    Returns a dict consumed by mlp_forward.
    """
    in_dim = int(weights[0].shape[0])
    out_dim = int(weights[-1].shape[1])
    in_pad = _round_up(in_dim, LANE)

    w_pads, b_pads = [], []
    prev_pad = in_pad
    for w, b in zip(weights, biases):
        b = jnp.asarray(b, jnp.float32).reshape(1, -1)
        kin, kout = w.shape
        kout_pad = _round_up(kout, LANE)
        wp = jnp.zeros((prev_pad, kout_pad), jnp.bfloat16).at[:kin, :kout].set(
            w.astype(jnp.bfloat16))
        # NOTE: padded bias columns are zero (not B_INIT) — see invariant comment above.
        bp = jnp.zeros((1, kout_pad), jnp.float32).at[:, :kout].set(b)
        w_pads.append(wp)
        b_pads.append(bp)
        prev_pad = kout_pad

    return {
        "w_pads": tuple(w_pads),
        "b_pads": tuple(b_pads),
        "in_dim": in_dim,
        "out_dim": out_dim,
        "in_pad": in_pad,
        "out_pad": prev_pad,
    }


def _vmem_cap_bytes():
    """Generation-aware VMEM ceiling (~80% of physical per-core VMEM)."""
    try:
        cap = int(pltpu.get_tpu_info().vmem_capacity_bytes)
    except Exception:
        cap = 64 << 20  # conservative fallback (works on v5e/v6e/v7x)
    return max(int(cap * 0.8), 4 << 20)


def _pick_tile_b(B):
    if B <= 256:
        # Single fat tile, grid=(1,); multiple of 16 rows (bf16 sublane packing).
        return _round_up(B, 16)
    # Large batch: >=2 grid steps so v7x's two TensorCores both get work; 256/512-row
    # tiles keep the 256x256 MXU on v6e/v7x filled.
    return min(_round_up(pl.cdiv(B, 2), 256), 512)


# --------------------------------------------------------------------------- forward
def mlp_forward(x, packed, *, tile_b=None):
    """Run Net.forward via a single Pallas kernel, tiled over the batch axis.

    x:      [B, in_features] float32
    packed: output of pack_params(weights, biases)
    Returns [B, out_features] float32
    """
    w_pads, b_pads = packed["w_pads"], packed["b_pads"]
    in_dim, out_dim = packed["in_dim"], packed["out_dim"]
    in_pad, out_pad = packed["in_pad"], packed["out_pad"]

    B = x.shape[0]
    if tile_b is None:
        tile_b = _pick_tile_b(B)
    B_pad = _round_up(B, tile_b)
    grid = (B_pad // tile_b,)
    single_step = grid[0] == 1

    # Only per-call work on the input: pad + bf16 cast of x.
    x_p = jnp.zeros((B_pad, in_pad), jnp.bfloat16).at[:B, :in_dim].set(
        x.astype(jnp.bfloat16))

    max_width = max([in_pad, out_pad] + [wp.shape[1] for wp in w_pads])
    weight_bytes = sum(int(wp.size) * 2 for wp in w_pads)
    bias_bytes = sum(int(bp.size) * 4 for bp in b_pads)
    flops = 2 * B_pad * sum(wp.shape[0] * wp.shape[1] for wp in w_pads)
    bytes_accessed = (
        int(x_p.size) * 2 + weight_bytes + bias_bytes + B_pad * out_pad * 4
    )
    cost = pl.CostEstimate(
        flops=flops, transcendentals=0, bytes_accessed=bytes_accessed
    )
    vmem_cap = _vmem_cap_bytes()

    def _spec(shape, index_map, single_buffer):
        if single_buffer:
            return pl.BlockSpec(shape, index_map, pipeline_mode=pl.Buffered(1))
        return pl.BlockSpec(shape, index_map)

    def _run(use_single_buffer):
        # x / out: double-buffer only if the pipeline actually has >1 step.
        io_single = use_single_buffer and single_step
        in_specs = [_spec((tile_b, in_pad), lambda i: (i, 0), io_single)]
        args = [x_p]
        for wp, bp in zip(w_pads, b_pads):
            # Grid-invariant params: constant index_map, whole array resident,
            # single VMEM copy (never re-DMA'd).
            in_specs.append(_spec(wp.shape, lambda i: (0, 0), use_single_buffer))
            in_specs.append(_spec(bp.shape, lambda i: (0, 0), use_single_buffer))
            args.extend([wp, bp])
        out_specs = _spec((tile_b, out_pad), lambda i: (i, 0), io_single)

        io_factor = 1 if io_single else 2
        param_factor = 1 if use_single_buffer else 2
        vmem_need = (
            io_factor * tile_b * in_pad * 2          # input tile(s), bf16
            + io_factor * tile_b * out_pad * 4       # output tile(s), f32
            + param_factor * (weight_bytes + bias_bytes)
            + 4 * tile_b * max_width * 4             # live intermediates headroom
        )
        vmem_limit = min(max(int(vmem_need * 1.5) + (1 << 20), 4 << 20), vmem_cap)

        return pl.pallas_call(
            _mlp_kernel,
            out_shape=jax.ShapeDtypeStruct((B_pad, out_pad), jnp.float32),
            grid_spec=pltpu.PrefetchScalarGridSpec(
                num_scalar_prefetch=0,
                grid=grid,
                in_specs=in_specs,
                out_specs=out_specs,
            ),
            compiler_params=pltpu.CompilerParams(
                dimension_semantics=("parallel",),
                vmem_limit_bytes=vmem_limit,
            ),
            cost_estimate=cost,
        )(*args)

    try:
        out_padded = _run(True)
    except Exception:
        # Fallback: this jax/Mosaic build rejected pipeline_mode=Buffered(1);
        # rerun with default (double-buffered) specs — correctness unaffected.
        out_padded = _run(False)

    return out_padded[:B, :out_dim]


# ------------------------------------------------------------------ init & references
def init_net_params(key, in_dim, out_dim, nb_hidden_layers, nb_hidden_nodes):
    """Deterministic parameter init mirroring Net._set_init:
    weights ~ Normal(0, 0.1), biases = B_INIT."""
    weights, biases = [], []
    dims_in = [in_dim] + [nb_hidden_nodes] * (nb_hidden_layers - 1)
    for i in range(nb_hidden_layers):
        key, sub = jax.random.split(key)
        # PyTorch Linear weight is [out, in]; we store its transpose [in, out].
        w = 0.1 * jax.random.normal(sub, (dims_in[i], nb_hidden_nodes), jnp.float32)
        b = jnp.full((1, nb_hidden_nodes), B_INIT, jnp.float32)
        weights.append(w)
        biases.append(b)
    key, sub = jax.random.split(key)
    w_pred = 0.1 * jax.random.normal(sub, (nb_hidden_nodes, out_dim), jnp.float32)
    b_pred = jnp.full((1, out_dim), B_INIT, jnp.float32)
    weights.append(w_pred)
    biases.append(b_pred)
    return weights, biases


def reference_forward_bf16(x, weights, biases):
    """Matched-precision reference: bf16 matmul operands, f32 accumulation."""
    h = x
    for w, b in zip(weights[:-1], biases[:-1]):
        h = jnp.maximum(
            jnp.dot(h.astype(jnp.bfloat16), w.astype(jnp.bfloat16),
                    preferred_element_type=jnp.float32) + b,
            0.0,
        )
    return (
        jnp.dot(h.astype(jnp.bfloat16), weights[-1].astype(jnp.bfloat16),
                preferred_element_type=jnp.float32)
        + biases[-1]
    )


def reference_forward_f32(x, weights, biases):
    h = x
    for w, b in zip(weights[:-1], biases[:-1]):
        h = jnp.maximum(h @ w + b, 0.0)
    return h @ weights[-1] + biases[-1]


if __name__ == "__main__":
    # Small shapes consistent with the module: Net(16, 8, 2, 32), batch=64.
    in_features = 16
    out_features = 8
    nb_hidden_layers = 2
    nb_hidden_nodes = 32
    batch = 64

    key = jax.random.PRNGKey(0)
    key, kx = jax.random.split(key)
    x = jax.random.normal(kx, (batch, in_features), jnp.float32)

    weights, biases = init_net_params(
        key, in_features, out_features, nb_hidden_layers, nb_hidden_nodes
    )

    # Padding / bf16 cast done once, outside the per-call path.
    packed = pack_params(weights, biases)

    out = mlp_forward(x, packed)
    out = jax.block_until_ready(out)
    assert out.shape == (batch, out_features)

    # Tight check against a bf16-matmul / f32-accumulate reference...
    ref_bf16 = reference_forward_bf16(x, weights, biases)
    assert jnp.allclose(out, ref_bf16, atol=1e-2, rtol=1e-2), "mismatch vs bf16 reference"
    # ...and a sanity check against the pure-f32 reference (bf16 rounding tolerance).
    ref_f32 = reference_forward_f32(x, weights, biases)
    assert jnp.allclose(out, ref_f32, atol=5e-2, rtol=5e-2), "mismatch vs f32 reference"

    print("KERNEL_OK")
</pallas_src>

<mosaic_0001>
module attributes {stable_mosaic.version = 11 : i64} {
  func.func @_mlp_kernel(%arg0: i32, %arg1: memref<64x128xbf16, #tpu.memory_space<vmem>>, %arg2: memref<128x128xbf16, #tpu.memory_space<vmem>>, %arg3: memref<1x128xf32, #tpu.memory_space<vmem>>, %arg4: memref<128x128xbf16, #tpu.memory_space<vmem>>, %arg5: memref<1x128xf32, #tpu.memory_space<vmem>>, %arg6: memref<128x128xbf16, #tpu.memory_space<vmem>>, %arg7: memref<1x128xf32, #tpu.memory_space<vmem>>, %arg8: memref<64x128xf32, #tpu.memory_space<vmem>>) attributes {dimension_semantics = [#tpu.dimension_semantics<parallel>], iteration_bounds = array<i64: 1>, scalar_prefetch = 0 : i64, scratch_operands = 0 : i64, tpu.core_type = #tpu.core_type<tc>, window_params = [{pipeline_mode = #tpu.pipeline_mode<synchronous>, transform_indices = @transform_0, window_bounds = array<i64: 64, 128>}, {pipeline_mode = #tpu.pipeline_mode<synchronous>, transform_indices = @transform_1, window_bounds = array<i64: 128, 128>}, {pipeline_mode = #tpu.pipeline_mode<synchronous>, transform_indices = @transform_2, window_bounds = array<i64: 1, 128>}, {pipeline_mode = #tpu.pipeline_mode<synchronous>, transform_indices = @transform_3, window_bounds = array<i64: 128, 128>}, {pipeline_mode = #tpu.pipeline_mode<synchronous>, transform_indices = @transform_4, window_bounds = array<i64: 1, 128>}, {pipeline_mode = #tpu.pipeline_mode<synchronous>, transform_indices = @transform_5, window_bounds = array<i64: 128, 128>}, {pipeline_mode = #tpu.pipeline_mode<synchronous>, transform_indices = @transform_6, window_bounds = array<i64: 1, 128>}, {pipeline_mode = #tpu.pipeline_mode<synchronous>, transform_indices = @transform_7, window_bounds = array<i64: 64, 128>}]} {
    %c0 = arith.constant 0 : index
    %c0_0 = arith.constant 0 : index
    %0 = vector.load %arg1[%c0, %c0_0] : memref<64x128xbf16, #tpu.memory_space<vmem>>, vector<64x128xbf16>
    %c0_1 = arith.constant 0 : index
    %c0_2 = arith.constant 0 : index
    %1 = vector.load %arg2[%c0_1, %c0_2] : memref<128x128xbf16, #tpu.memory_space<vmem>>, vector<128x128xbf16>
    %c0_3 = arith.constant 0 : index
    %c0_4 = arith.constant 0 : index
    %2 = vector.load %arg3[%c0_3, %c0_4] : memref<1x128xf32, #tpu.memory_space<vmem>>, vector<1x128xf32>
    %cst = arith.constant dense<0.000000e+00> : vector<64x128xf32>
    %3 = tpu.matmul %0, %1, %cst {dimension_numbers = #tpu.dot_dimension_numbers<[1], [0], [0], [1], [0, 0, 1, 1], [], []>} : vector<64x128xbf16>, vector<128x128xbf16>, vector<64x128xf32> -> vector<64x128xf32>
    %4 = vector.broadcast %2 : vector<1x128xf32> to vector<64x128xf32>
    %5 = arith.addf %3, %4 : vector<64x128xf32>
    %cst_5 = arith.constant 0.000000e+00 : f32
    %6 = vector.broadcast %cst_5 : f32 to vector<64x128xf32>
    %7 = arith.maximumf %5, %6 : vector<64x128xf32>
    %8 = arith.truncf %7 : vector<64x128xf32> to vector<64x128xbf16>
    %c0_6 = arith.constant 0 : index
    %c0_7 = arith.constant 0 : index
    %9 = vector.load %arg4[%c0_6, %c0_7] : memref<128x128xbf16, #tpu.memory_space<vmem>>, vector<128x128xbf16>
    %c0_8 = arith.constant 0 : index
    %c0_9 = arith.constant 0 : index
    %10 = vector.load %arg5[%c0_8, %c0_9] : memref<1x128xf32, #tpu.memory_space<vmem>>, vector<1x128xf32>
    %cst_10 = arith.constant dense<0.000000e+00> : vector<64x128xf32>
    %11 = tpu.matmul %8, %9, %cst_10 {dimension_numbers = #tpu.dot_dimension_numbers<[1], [0], [0], [1], [0, 0, 1, 1], [], []>} : vector<64x128xbf16>, vector<128x128xbf16>, vector<64x128xf32> -> vector<64x128xf32>
    %12 = vector.broadcast %10 : vector<1x128xf32> to vector<64x128xf32>
    %13 = arith.addf %11, %12 : vector<64x128xf32>
    %cst_11 = arith.constant 0.000000e+00 : f32
    %14 = vector.broadcast %cst_11 : f32 to vector<64x128xf32>
    %15 = arith.maximumf %13, %14 : vector<64x128xf32>
    %16 = arith.truncf %15 : vector<64x128xf32> to vector<64x128xbf16>
    %c0_12 = arith.constant 0 : index
    %c0_13 = arith.constant 0 : index
    %17 = vector.load %arg6[%c0_12, %c0_13] : memref<128x128xbf16, #tpu.memory_space<vmem>>, vector<128x128xbf16>
    %c0_14 = arith.constant 0 : index
    %c0_15 = arith.constant 0 : index
    %18 = vector.load %arg7[%c0_14, %c0_15] : memref<1x128xf32, #tpu.memory_space<vmem>>, vector<1x128xf32>
    %cst_16 = arith.constant dense<0.000000e+00> : vector<64x128xf32>
    %19 = tpu.matmul %16, %17, %cst_16 {dimension_numbers = #tpu.dot_dimension_numbers<[1], [0], [0], [1], [0, 0, 1, 1], [], []>} : vector<64x128xbf16>, vector<128x128xbf16>, vector<64x128xf32> -> vector<64x128xf32>
    %20 = vector.broadcast %18 : vector<1x128xf32> to vector<64x128xf32>
    %21 = arith.addf %19, %20 : vector<64x128xf32>
    %c0_17 = arith.constant 0 : index
    %c0_18 = arith.constant 0 : index
    %22 = vector.load %arg8[%c0_17, %c0_18] : memref<64x128xf32, #tpu.memory_space<vmem>>, vector<64x128xf32>
    tpu.vector_store %arg8[%c0_17, %c0_18], %21 {strides = array<i32>} : memref<64x128xf32, #tpu.memory_space<vmem>>, vector<64x128xf32>,
    return
  }
  func.func @transform_0(%arg0: i32) -> (i32, i32) {
    %c0_i32 = arith.constant 0 : i32
    %c0_i32_0 = arith.constant 0 : i32
    return %arg0, %c0_i32 : i32, i32
  }
  func.func @transform_1(%arg0: i32) -> (i32, i32) {
    %c0_i32 = arith.constant 0 : i32
    %c0_i32_0 = arith.constant 0 : i32
    %c0_i32_1 = arith.constant 0 : i32
    return %c0_i32, %c0_i32_0 : i32, i32
  }
  func.func @transform_2(%arg0: i32) -> (i32, i32) {
    %c0_i32 = arith.constant 0 : i32
    %c0_i32_0 = arith.constant 0 : i32
    %c0_i32_1 = arith.constant 0 : i32
    return %c0_i32, %c0_i32_0 : i32, i32
  }
  func.func @transform_3(%arg0: i32) -> (i32, i32) {
    %c0_i32 = arith.constant 0 : i32
    %c0_i32_0 = arith.constant 0 : i32
    %c0_i32_1 = arith.constant 0 : i32
    return %c0_i32, %c0_i32_0 : i32, i32
  }
  func.func @transform_4(%arg0: i32) -> (i32, i32) {
    %c0_i32 = arith.constant 0 : i32
    %c0_i32_0 = arith.constant 0 : i32
    %c0_i32_1 = arith.constant 0 : i32
    return %c0_i32, %c0_i32_0 : i32, i32
  }
  func.func @transform_5(%arg0: i32) -> (i32, i32) {
    %c0_i32 = arith.constant 0 : i32
    %c0_i32_0 = arith.constant 0 : i32
    %c0_i32_1 = arith.constant 0 : i32
    return %c0_i32, %c0_i32_0 : i32, i32
  }
  func.func @transform_6(%arg0: i32) -> (i32, i32) {
    %c0_i32 = arith.constant 0 : i32
    %c0_i32_0 = arith.constant 0 : i32
    %c0_i32_1 = arith.constant 0 : i32
    return %c0_i32, %c0_i32_0 : i32, i32
  }
  func.func @transform_7(%arg0: i32) -> (i32, i32) {
    %c0_i32 = arith.constant 0 : i32
    %c0_i32_0 = arith.constant 0 : i32
    return %arg0, %c0_i32 : i32, i32
  }
}

module attributes {stable_mosaic.version = 11 : i64} {
  func.func @_mlp_kernel(%arg0: i32, %arg1: memref<64x128xbf16, #tpu.memory_space<vmem>>, %arg2: memref<128x128xbf16, #tpu.memory_space<vmem>>, %arg3: memref<1x128xf32, #tpu.memory_space<vmem>>, %arg4: memref<128x128xbf16, #tpu.memory_space<vmem>>, %arg5: memref<1x128xf32, #tpu.memory_space<vmem>>, %arg6: memref<128x128xbf16, #tpu.memory_space<vmem>>, %arg7: memref<1x128xf32, #tpu.memory_space<vmem>>, %arg8: memref<64x128xf32, #tpu.memory_space<vmem>>) attributes {dimension_semantics = [#tpu.dimension_semantics<parallel>], iteration_bounds = array<i64: 1>, scalar_prefetch = 0 : i64, scratch_operands = 0 : i64, tpu.core_type = #tpu.core_type<tc>, window_params = [{transform_indices = @transform_0, window_bounds = array<i64: 64, 128>}, {pipeline_mode = #tpu.pipeline_mode<synchronous>, transform_indices = @transform_1, window_bounds = array<i64: 128, 128>}, {pipeline_mode = #tpu.pipeline_mode<synchronous>, transform_indices = @transform_2, window_bounds = array<i64: 1, 128>}, {pipeline_mode = #tpu.pipeline_mode<synchronous>, transform_indices = @transform_3, window_bounds = array<i64: 128, 128>}, {pipeline_mode = #tpu.pipeline_mode<synchronous>, transform_indices = @transform_4, window_bounds = array<i64: 1, 128>}, {pipeline_mode = #tpu.pipeline_mode<synchronous>, transform_indices = @transform_5, window_bounds = array<i64: 128, 128>}, {pipeline_mode = #tpu.pipeline_mode<synchronous>, transform_indices = @transform_6, window_bounds = array<i64: 1, 128>}, {transform_indices = @transform_7, window_bounds = array<i64: 64, 128>}]} {
    %c0 = arith.constant 0 : index
    %c0_0 = arith.constant 0 : index
    %0 = vector.load %arg1[%c0, %c0_0] : memref<64x128xbf16, #tpu.memory_space<vmem>>, vector<64x128xbf16>
    %c0_1 = arith.constant 0 : index
    %c0_2 = arith.constant 0 : index
    %1 = vector.load %arg2[%c0_1, %c0_2] : memref<128x128xbf16, #tpu.memory_space<vmem>>, vector<128x128xbf16>
    %c0_3 = arith.constant 0 : index
    %c0_4 = arith.constant 0 : index
    %2 = vector.load %arg3[%c0_3, %c0_4] : memref<1x128xf32, #tpu.memory_space<vmem>>, vector<1x128xf32>
    %cst = arith.constant dense<0.000000e+00> : vector<64x128xf32>
    %3 = tpu.matmul %0, %1, %cst {dimension_numbers = #tpu.dot_dimension_numbers<[1], [0], [0], [1], [0, 0, 1, 1], [], []>} : vector<64x128xbf16>, vector<128x128xbf16>, vector<64x128xf32> -> vector<64x128xf32>
    %4 = vector.broadcast %2 : vector<1x128xf32> to vector<64x128xf32>
    %5 = arith.addf %3, %4 : vector<64x128xf32>
    %cst_5 = arith.constant 0.000000e+00 : f32
    %6 = vector.broadcast %cst_5 : f32 to vector<64x128xf32>
    %7 = arith.maximumf %5, %6 : vector<64x128xf32>
    %8 = arith.truncf %7 : vector<64x128xf32> to vector<64x128xbf16>
    %c0_6 = arith.constant 0 : index
    %c0_7 = arith.constant 0 : index
    %9 = vector.load %arg4[%c0_6, %c0_7] : memref<128x128xbf16, #tpu.memory_space<vmem>>, vector<128x128xbf16>
    %c0_8 = arith.constant 0 : index
    %c0_9 = arith.constant 0 : index
    %10 = vector.load %arg5[%c0_8, %c0_9] : memref<1x128xf32, #tpu.memory_space<vmem>>, vector<1x128xf32>
    %cst_10 = arith.constant dense<0.000000e+00> : vector<64x128xf32>
    %11 = tpu.matmul %8, %9, %cst_10 {dimension_numbers = #tpu.dot_dimension_numbers<[1], [0], [0], [1], [0, 0, 1, 1], [], []>} : vector<64x128xbf16>, vector<128x128xbf16>, vector<64x128xf32> -> vector<64x128xf32>
    %12 = vector.broadcast %10 : vector<1x128xf32> to vector<64x128xf32>
    %13 = arith.addf %11, %12 : vector<64x128xf32>
    %cst_11 = arith.constant 0.000000e+00 : f32
    %14 = vector.broadcast %cst_11 : f32 to vector<64x128xf32>
    %15 = arith.maximumf %13, %14 : vector<64x128xf32>
    %16 = arith.truncf %15 : vector<64x128xf32> to vector<64x128xbf16>
    %c0_12 = arith.constant 0 : index
    %c0_13 = arith.constant 0 : index
    %17 = vector.load %arg6[%c0_12, %c0_13] : memref<128x128xbf16, #tpu.memory_space<vmem>>, vector<128x128xbf16>
    %c0_14 = arith.constant 0 : index
    %c0_15 = arith.constant 0 : index
    %18 = vector.load %arg7[%c0_14, %c0_15] : memref<1x128xf32, #tpu.memory_space<vmem>>, vector<1x128xf32>
    %cst_16 = arith.constant dense<0.000000e+00> : vector<64x128xf32>
    %19 = tpu.matmul %16, %17, %cst_16 {dimension_numbers = #tpu.dot_dimension_numbers<[1], [0], [0], [1], [0, 0, 1, 1], [], []>} : vector<64x128xbf16>, vector<128x128xbf16>, vector<64x128xf32> -> vector<64x128xf32>
    %20 = vector.broadcast %18 : vector<1x128xf32> to vector<64x128xf32>
    %21 = arith.addf %19, %20 : vector<64x128xf32>
    %c0_17 = arith.constant 0 : index
    %c0_18 = arith.constant 0 : index
    %22 = vector.load %arg8[%c0_17, %c0_18] : memref<64x128xf32, #tpu.memory_space<vmem>>, vector<64x128xf32>
    tpu.vector_store %arg8[%c0_17, %c0_18], %21 {strides = array<i32>} : memref<64x128xf32, #tpu.memory_space<vmem>>, vector<64x128xf32>,
    return
  }
  func.func @transform_0(%arg0: i32) -> (i32, i32) {
    %c0_i32 = arith.constant 0 : i32
    %c0_i32_0 = arith.constant 0 : i32
    return %arg0, %c0_i32 : i32, i32
  }
  func.func @transform_1(%arg0: i32) -> (i32, i32) {
    %c0_i32 = arith.constant 0 : i32
    %c0_i32_0 = arith.constant 0 : i32
    %c0_i32_1 = arith.constant 0 : i32
    return %c0_i32, %c0_i32_0 : i32, i32
  }
  func.func @transform_2(%arg0: i32) -> (i32, i32) {
    %c0_i32 = arith.constant 0 : i32
    %c0_i32_0 = arith.constant 0 : i32
    %c0_i32_1 = arith.constant 0 : i32
    return %c0_i32, %c0_i32_0 : i32, i32
  }
  func.func @transform_3(%arg0: i32) -> (i32, i32) {
    %c0_i32 = arith.constant 0 : i32
    %c0_i32_0 = arith.constant 0 : i32
    %c0_i32_1 = arith.constant 0 : i32
    return %c0_i32, %c0_i32_0 : i32, i32
  }
  func.func @transform_4(%arg0: i32) -> (i32, i32) {
    %c0_i32 = arith.constant 0 : i32
    %c0_i32_0 = arith.constant 0 : i32
    %c0_i32_1 = arith.constant 0 : i32
    return %c0_i32, %c0_i32_0 : i32, i32
  }
  func.func @transform_5(%arg0: i32) -> (i32, i32) {
    %c0_i32 = arith.constant 0 : i32
    %c0_i32_0 = arith.constant 0 : i32
    %c0_i32_1 = arith.constant 0 : i32
    return %c0_i32, %c0_i32_0 : i32, i32
  }
  func.func @transform_6(%arg0: i32) -> (i32, i32) {
    %c0_i32 = arith.constant 0 : i32
    %c0_i32_0 = arith.constant 0 : i32
    %c0_i32_1 = arith.constant 0 : i32
    return %c0_i32, %c0_i32_0 : i32, i32
  }
  func.func @transform_7(%arg0: i32) -> (i32, i32) {
    %c0_i32 = arith.constant 0 : i32
    %c0_i32_0 = arith.constant 0 : i32
    return %arg0, %c0_i32 : i32, i32
  }
}

</mosaic_0001>

<llo_original>
// kernel: tpu_custom_call.1
$region0: #{tpu_custom_call.1}
  #allocation0 [shape = 'u32[]', space=smem, size = 0x4, offset = 0x4, fixed_abs, tag = 'smem constant byte address 0x4 - core index']
  #allocation1 [shape = 'u32[72,128]{1,0:T(1,128)}', space=vmem, size = 0x9000, scoped, tag = 'internal scratch']
  %s0 = inlined_call_operand.hbm [shape: bf16[64,128], index: 0, kind: input, shape index: {}]
  %s1 = inlined_call_operand.hbm [shape: bf16[128,128], index: 1, kind: input, shape index: {}]
  %s2 = inlined_call_operand.vmem [shape: f32[1,128], index: 2, kind: input, shape index: {}]
  %s3 = inlined_call_operand.hbm [shape: bf16[128,128], index: 3, kind: input, shape index: {}]
  %s4 = inlined_call_operand.vmem [shape: f32[1,128], index: 4, kind: input, shape index: {}]
  %s5 = inlined_call_operand.hbm [shape: bf16[128,128], index: 5, kind: input, shape index: {}]
  %s6 = inlined_call_operand.vmem [shape: f32[1,128], index: 6, kind: input, shape index: {}]
  %s7 = inlined_call_operand.hbm [shape: f32[64,128], index: 7, kind: output, shape index: {}]
  %s8 = sld [smem:[#allocation0]]
  $region54: #{tpu_custom_call.1} parent=0
    _
  %s10 = ssub.s32 1, %s8
  %s11 = scalar_select 0, %s10, %s8
  $region1: #{tpu_custom_call.1} parent=0
    #allocation2 [shape = 'u8[16384]{0}', space=vmem, size = 0x4000, scoped, tag = 'input window, operand 0, single buffered']
    #allocation3 [shape = 's32[1]{0}', space=sflag, size = 0x4, scoped, tag = 'scoped memory for tpu_custom_call.1']
    #allocation4 [shape = 's32[1]{0}', space=sflag, size = 0x4, scoped, tag = 'scoped memory for tpu_custom_call.1']
    #allocation5 [shape = 'u8[32768]{0}', space=vmem, size = 0x8000, scoped, tag = 'input window, operand 1, single buffered']
    #allocation6 [shape = 's32[1]{0}', space=sflag, size = 0x4, scoped, tag = 'scoped memory for tpu_custom_call.1']
    #allocation7 [shape = 'u8[32768]{0}', space=vmem, size = 0x8000, scoped, tag = 'input window, operand 3, single buffered']
    #allocation8 [shape = 'u8[32768]{0}', space=vmem, size = 0x8000, scoped, tag = 'input window, operand 5, single buffered']
    #allocation9 [shape = 's32[1]{0}', space=sflag, size = 0x4, scoped, tag = 'scoped memory for tpu_custom_call.1']
    #allocation10 [shape = 'u8[32768]{0}', space=vmem, size = 0x8000, scoped, tag = 'output window, operand 0, single buffered']
    %12 = vsyncpa [#allocation3], 0
    %13 = vsyncpa [#allocation6], 0
    %14 = vsyncpa [#allocation9], 0
    %15 = vsyncpa [#allocation4], 0
    // Predicated region
    $region2: #{tpu_custom_call.1} parent=1 // pred_check
      _
    $region3: #{tpu_custom_call.1} parent=1 // pred_check_branch
      %17 = sbr.rel (0) target = $region5
    $region4: #{tpu_custom_call.1} parent=1 // pred_region
      %19 = vsyncadd [#allocation3], 0
      %s20 = sshll.u32 %s0, 4
      %s21 = int_to_ptr.hbm [resolvable:$true] %s20
      %s22 = sshll.u32 [#allocation2], 4
      %s23 = int_to_ptr.vmem [resolvable:$true] %s22
      %28 = dma.hbm_to_vmem [thread:$0]  %s21, 512, %s23, [#allocation3], 64, 64, 4
    $region5: #{tpu_custom_call.1} parent=1 // pred_fallthru
      _
    // Predicated region
    $region6: #{tpu_custom_call.1} parent=1 // pred_check
      _
    $region7: #{tpu_custom_call.1} parent=1 // pred_check_branch
      %30 = sbr.rel (0) target = $region9
    $region8: #{tpu_custom_call.1} parent=1 // pred_region
      %32 = vsyncadd [#allocation6], 0
      %s33 = sshll.u32 %s1, 4
      %s34 = int_to_ptr.hbm [resolvable:$true] %s33
      %s35 = sshll.u32 [#allocation5], 4
      %s36 = int_to_ptr.vmem [resolvable:$true] %s35
      %41 = dma.hbm_to_vmem [thread:$0]  %s34, 1024, %s36, [#allocation6], 64, 64, 4
    $region9: #{tpu_custom_call.1} parent=1 // pred_fallthru
      _
    // Predicated region
    $region10: #{tpu_custom_call.1} parent=1 // pred_check
      _
    $region11: #{tpu_custom_call.1} parent=1 // pred_check_branch
      %43 = sbr.rel (0) target = $region13
    $region12: #{tpu_custom_call.1} parent=1 // pred_region
      _
    $region13: #{tpu_custom_call.1} parent=1 // pred_fallthru
      _
    // Predicated region
    $region14: #{tpu_custom_call.1} parent=1 // pred_check
      _
    $region15: #{tpu_custom_call.1} parent=1 // pred_check_branch
      %45 = sbr.rel (0) target = $region17
    $region16: #{tpu_custom_call.1} parent=1 // pred_region
      %47 = vsyncadd [#allocation6], 0
      %s48 = sshll.u32 %s3, 4
      %s49 = int_to_ptr.hbm [resolvable:$true] %s48
      %s50 = sshll.u32 [#allocation7], 4
      %s51 = int_to_ptr.vmem [resolvable:$true] %s50
      %56 = dma.hbm_to_vmem [thread:$0]  %s49, 1024, %s51, [#allocation6], 64, 64, 4
    $region17: #{tpu_custom_call.1} parent=1 // pred_fallthru
      _
    // Predicated region
    $region18: #{tpu_custom_call.1} parent=1 // pred_check
      _
    $region19: #{tpu_custom_call.1} parent=1 // pred_check_branch
      %58 = sbr.rel (0) target = $region21
    $region20: #{tpu_custom_call.1} parent=1 // pred_region
      _
    $region21: #{tpu_custom_call.1} parent=1 // pred_fallthru
      _
    // Predicated region
    $region22: #{tpu_custom_call.1} parent=1 // pred_check
      _
    $region23: #{tpu_custom_call.1} parent=1 // pred_check_branch
      %60 = sbr.rel (0) target = $region25
    $region24: #{tpu_custom_call.1} parent=1 // pred_region
      %62 = vsyncadd [#allocation9], 0
      %s63 = sshll.u32 %s5, 4
      %s64 = int_to_ptr.hbm [resolvable:$true] %s63
      %s65 = sshll.u32 [#allocation8], 4
      %s66 = int_to_ptr.vmem [resolvable:$true] %s65
      %71 = dma.hbm_to_vmem [thread:$0]  %s64, 1024, %s66, [#allocation9], 64, 64, 4
    $region25: #{tpu_custom_call.1} parent=1 // pred_fallthru
      _
    // Predicated region
    $region26: #{tpu_custom_call.1} parent=1 // pred_check
      _
    $region27: #{tpu_custom_call.1} parent=1 // pred_check_branch
      %73 = sbr.rel (0) target = $region29
    $region28: #{tpu_custom_call.1} parent=1 // pred_region
      _
    $region29: #{tpu_custom_call.1} parent=1 // pred_fallthru
      _
    // Predicated region
    $region30: #{tpu_custom_call.1} parent=1 // pred_check
      _
    $region31: #{tpu_custom_call.1} parent=1 // pred_check_branch
      %75 = sbr.rel (0) target = $region33
    $region32: #{tpu_custom_call.1} parent=1 // pred_region
      %77 = dma.done [#allocation3], 512
    $region33: #{tpu_custom_call.1} parent=1 // pred_fallthru
      _
    // Predicated region
    $region34: #{tpu_custom_call.1} parent=1 // pred_check
      _
    $region35: #{tpu_custom_call.1} parent=1 // pred_check_branch
      %79 = sbr.rel (0) target = $region37
    $region36: #{tpu_custom_call.1} parent=1 // pred_region
      %81 = dma.done [#allocation6], 1024
    $region37: #{tpu_custom_call.1} parent=1 // pred_fallthru
      _
    // Predicated region
    $region38: #{tpu_custom_call.1} parent=1 // pred_check
      _
    $region39: #{tpu_custom_call.1} parent=1 // pred_check_branch
      %83 = sbr.rel (0) target = $region41
    $region40: #{tpu_custom_call.1} parent=1 // pred_region
      %85 = dma.done [#allocation6], 1024
    $region41: #{tpu_custom_call.1} parent=1 // pred_fallthru
      _
    // Predicated region
    $region42: #{tpu_custom_call.1} parent=1 // pred_check
      _
    $region43: #{tpu_custom_call.1} parent=1 // pred_check_branch
      %87 = sbr.rel (0) target = $region45
    $region44: #{tpu_custom_call.1} parent=1 // pred_region
      %89 = dma.done [#allocation9], 1024
    $region45: #{tpu_custom_call.1} parent=1 // pred_fallthru
      _
    %v90 = vld [vmem:[#allocation2] sm:$0xf]
    %v91 = vld [vmem:[#allocation2 + $0x4] sm:$0xf]
    %v92 = vld [vmem:[#allocation2 + $0x8] sm:$0xf]
    %v93 = vld [vmem:[#allocation2 + $0xc] sm:$0xf]
    %v94 = vld [vmem:[#allocation2 + $0x10] sm:$0xf]
    %v95 = vld [vmem:[#allocation2 + $0x14] sm:$0xf]
    %v96 = vld [vmem:[#allocation2 + $0x18] sm:$0xf]
    %v97 = vld [vmem:[#allocation2 + $0x1c] sm:$0xf]
    %v98 = vld [vmem:[#allocation5] sm:$0xf]
    %v99 = vld [vmem:[#allocation5 + $0x4] sm:$0xf]
    %v100 = vld [vmem:[#allocation5 + $0x8] sm:$0xf]
    %v101 = vld [vmem:[#allocation5 + $0xc] sm:$0xf]
    %v102 = vld [vmem:[#allocation5 + $0x10] sm:$0xf]
    %v103 = vld [vmem:[#allocation5 + $0x14] sm:$0xf]
    %v104 = vld [vmem:[#allocation5 + $0x18] sm:$0xf]
    %v105 = vld [vmem:[#allocation5 + $0x1c] sm:$0xf]
    %v106 = vld [vmem:[#allocation5 + $0x20] sm:$0xf]
    %v107 = vld [vmem:[#allocation5 + $0x24] sm:$0xf]
    %v108 = vld [vmem:[#allocation5 + $0x28] sm:$0xf]
    %v109 = vld [vmem:[#allocation5 + $0x2c] sm:$0xf]
    %v110 = vld [vmem:[#allocation5 + $0x30] sm:$0xf]
    %v111 = vld [vmem:[#allocation5 + $0x34] sm:$0xf]
    %v112 = vld [vmem:[#allocation5 + $0x38] sm:$0xf]
    %v113 = vld [vmem:[#allocation5 + $0x3c] sm:$0xf]
    %v114 = vld [vmem:[%s2] sm:$0x1]
    %v116 = vperm.slane %v114, 0
    %v126 = vunpack.c.l.b16 %v90
    %v127 = vunpack.c.l.b16 %v91
    %v128 = vunpack.c.l.b16 %v92
    %v129 = vunpack.c.l.b16 %v93
    %v130 = vunpack.c.l.b16 %v94
    %v131 = vunpack.c.l.b16 %v95
    %v132 = vunpack.c.l.b16 %v96
    %v133 = vunpack.c.l.b16 %v97
    %v134 = vpack.c.b16 %v127, %v126
    %v135 = vpack.c.b16 %v129, %v128
    %v136 = vpack.c.b16 %v131, %v130
    %v137 = vpack.c.b16 %v133, %v132
    %v158 = vunpack.c.l.b16 %v98
    %v159 = vunpack.c.l.b16 %v99
    %v160 = vunpack.c.l.b16 %v100
    %v161 = vunpack.c.l.b16 %v101
    %v162 = vunpack.c.l.b16 %v102
    %v163 = vunpack.c.l.b16 %v103
    %v164 = vunpack.c.l.b16 %v104
    %v165 = vunpack.c.l.b16 %v105
    %v166 = vunpack.c.l.b16 %v106
    %v167 = vunpack.c.l.b16 %v107
    %v168 = vunpack.c.l.b16 %v108
    %v169 = vunpack.c.l.b16 %v109
    %v170 = vunpack.c.l.b16 %v110
    %v171 = vunpack.c.l.b16 %v111
    %v172 = vunpack.c.l.b16 %v112
    %v173 = vunpack.c.l.b16 %v113
    %v174 = vpack.c.b16 %v159, %v158
    %v175 = vpack.c.b16 %v161, %v160
    %v176 = vpack.c.b16 %v163, %v162
    %v177 = vpack.c.b16 %v165, %v164
    %v178 = vpack.c.b16 %v167, %v166
    %v179 = vpack.c.b16 %v169, %v168
    %v180 = vpack.c.b16 %v171, %v170
    %v181 = vpack.c.b16 %v173, %v172
    %190 = vmatpush.bf16.msra.mxu0 %v181
    %191 = vmatpush.bf16.msra.mxu0 %v180
    %192 = vmatpush.bf16.msra.mxu0 %v179
    %193 = vmatpush.bf16.msra.mxu0 %v178
    %194 = vmatpush.bf16.msra.mxu0 %v177
    %195 = vmatpush.bf16.msra.mxu0 %v176
    %196 = vmatpush.bf16.msra.mxu0 %v175
    %197 = vmatpush.bf16.msra.mxu0 %v174
    %198 = vmatmul.bf16.gmra.mxu0 %v134
    %v199 = vpop.f32.mrf.mxu0
    %v200 = vadd.f32 %v116, %v199
    %v201 = vpop.f32.mrf.mxu0
    %v202 = vadd.f32 %v116, %v201
    %203 = vmatmul.bf16.gmra.mxu0 %v135
    %v204 = vpop.f32.mrf.mxu0
    %v205 = vadd.f32 %v116, %v204
    %v206 = vpop.f32.mrf.mxu0
    %v207 = vadd.f32 %v116, %v206
    %208 = vmatmul.bf16.gmra.mxu0 %v136
    %v209 = vpop.f32.mrf.mxu0
    %v210 = vadd.f32 %v116, %v209
    %v211 = vpop.f32.mrf.mxu0
    %v212 = vadd.f32 %v116, %v211
    %213 = vmatmul.bf16.gmra.mxu0 %v137
    %v214 = vpop.f32.mrf.mxu0
    %v215 = vadd.f32 %v116, %v214
    %v216 = vpop.f32.mrf.mxu0
    %v217 = vadd.f32 %v116, %v216
    %218 = vdwg.mxu0
    %v219 = vmax.f32 %v200, 0.0
    %v220 = vmax.f32 %v202, 0.0
    %v221 = vmax.f32 %v205, 0.0
    %v222 = vmax.f32 %v207, 0.0
    %v223 = vmax.f32 %v210, 0.0
    %v224 = vmax.f32 %v212, 0.0
    %v225 = vmax.f32 %v215, 0.0
    %v226 = vmax.f32 %v217, 0.0
    %v227 = vpack.c.bf16 %v220, %v219
    %v228 = vpack.c.bf16 %v222, %v221
    %v229 = vpack.c.bf16 %v224, %v223
    %v230 = vpack.c.bf16 %v226, %v225
    %v231 = vld [vmem:[#allocation7] sm:$0xf]
    %v232 = vld [vmem:[#allocation7 + $0x4] sm:$0xf]
    %v233 = vld [vmem:[#allocation7 + $0x8] sm:$0xf]
    %v234 = vld [vmem:[#allocation7 + $0xc] sm:$0xf]
    %v235 = vld [vmem:[#allocation7 + $0x10] sm:$0xf]
    %v236 = vld [vmem:[#allocation7 + $0x14] sm:$0xf]
    %v237 = vld [vmem:[#allocation7 + $0x18] sm:$0xf]
    %v238 = vld [vmem:[#allocation7 + $0x1c] sm:$0xf]
    %v239 = vld [vmem:[#allocation7 + $0x20] sm:$0xf]
    %v240 = vld [vmem:[#allocation7 + $0x24] sm:$0xf]
    %v241 = vld [vmem:[#allocation7 + $0x28] sm:$0xf]
    %v242 = vld [vmem:[#allocation7 + $0x2c] sm:$0xf]
    %v243 = vld [vmem:[#allocation7 + $0x30] sm:$0xf]
    %v244 = vld [vmem:[#allocation7 + $0x34] sm:$0xf]
    %v245 = vld [vmem:[#allocation7 + $0x38] sm:$0xf]
    %v246 = vld [vmem:[#allocation7 + $0x3c] sm:$0xf]
    %v247 = vld [vmem:[%s4] sm:$0x1]
    %v249 = vperm.slane %v247, 0
    %v267 = vunpack.c.l.b16 %v231
    %v268 = vunpack.c.l.b16 %v232
    %v269 = vunpack.c.l.b16 %v233
    %v270 = vunpack.c.l.b16 %v234
    %v271 = vunpack.c.l.b16 %v235
    %v272 = vunpack.c.l.b16 %v236
    %v273 = vunpack.c.l.b16 %v237
    %v274 = vunpack.c.l.b16 %v238
    %v275 = vunpack.c.l.b16 %v239
    %v276 = vunpack.c.l.b16 %v240
    %v277 = vunpack.c.l.b16 %v241
    %v278 = vunpack.c.l.b16 %v242
    %v279 = vunpack.c.l.b16 %v243
    %v280 = vunpack.c.l.b16 %v244
    %v281 = vunpack.c.l.b16 %v245
    %v282 = vunpack.c.l.b16 %v246
    %v283 = vpack.c.b16 %v268, %v267
    %v284 = vpack.c.b16 %v270, %v269
    %v285 = vpack.c.b16 %v272, %v271
    %v286 = vpack.c.b16 %v274, %v273
    %v287 = vpack.c.b16 %v276, %v275
    %v288 = vpack.c.b16 %v278, %v277
    %v289 = vpack.c.b16 %v280, %v279
    %v290 = vpack.c.b16 %v282, %v281
    %299 = vmatpush.bf16.msra.mxu0 %v290
    %300 = vmatpush.bf16.msra.mxu0 %v289
    %301 = vmatpush.bf16.msra.mxu0 %v288
    %302 = vmatpush.bf16.msra.mxu0 %v287
    %303 = vmatpush.bf16.msra.mxu0 %v286
    %304 = vmatpush.bf16.msra.mxu0 %v285
    %305 = vmatpush.bf16.msra.mxu0 %v284
    %306 = vmatpush.bf16.msra.mxu0 %v283
    %307 = vmatmul.bf16.gmra.mxu0 %v227
    %v308 = vpop.f32.mrf.mxu0
    %v309 = vadd.f32 %v249, %v308
    %v310 = vpop.f32.mrf.mxu0
    %v311 = vadd.f32 %v249, %v310
    %312 = vmatmul.bf16.gmra.mxu0 %v228
    %v313 = vpop.f32.mrf.mxu0
    %v314 = vadd.f32 %v249, %v313
    %v315 = vpop.f32.mrf.mxu0
    %v316 = vadd.f32 %v249, %v315
    %317 = vmatmul.bf16.gmra.mxu0 %v229
    %v318 = vpop.f32.mrf.mxu0
    %v319 = vadd.f32 %v249, %v318
    %v320 = vpop.f32.mrf.mxu0
    %v321 = vadd.f32 %v249, %v320
    %322 = vmatmul.bf16.gmra.mxu0 %v230
    %v323 = vpop.f32.mrf.mxu0
    %v324 = vadd.f32 %v249, %v323
    %v325 = vpop.f32.mrf.mxu0
    %v326 = vadd.f32 %v249, %v325
    %327 = vdwg.mxu0
    %v328 = vmax.f32 %v309, 0.0
    %v329 = vmax.f32 %v311, 0.0
    %v330 = vmax.f32 %v314, 0.0
    %v331 = vmax.f32 %v316, 0.0
    %v332 = vmax.f32 %v319, 0.0
    %v333 = vmax.f32 %v321, 0.0
    %v334 = vmax.f32 %v324, 0.0
    %v335 = vmax.f32 %v326, 0.0
    %v336 = vpack.c.bf16 %v329, %v328
    %v337 = vpack.c.bf16 %v331, %v330
    %v338 = vpack.c.bf16 %v333, %v332
    %v339 = vpack.c.bf16 %v335, %v334
    %v340 = vld [vmem:[#allocation8] sm:$0xf]
    %v341 = vld [vmem:[#allocation8 + $0x4] sm:$0xf]
    %v342 = vld [vmem:[#allocation8 + $0x8] sm:$0xf]
    %v343 = vld [vmem:[#allocation8 + $0xc] sm:$0xf]
    %v344 = vld [vmem:[#allocation8 + $0x10] sm:$0xf]
    %v345 = vld [vmem:[#allocation8 + $0x14] sm:$0xf]
    %v346 = vld [vmem:[#allocation8 + $0x18] sm:$0xf]
    %v347 = vld [vmem:[#allocation8 + $0x1c] sm:$0xf]
    %v348 = vld [vmem:[#allocation8 + $0x20] sm:$0xf]
    %v349 = vld [vmem:[#allocation8 + $0x24] sm:$0xf]
    %v350 = vld [vmem:[#allocation8 + $0x28] sm:$0xf]
    %v351 = vld [vmem:[#allocation8 + $0x2c] sm:$0xf]
    %v352 = vld [vmem:[#allocation8 + $0x30] sm:$0xf]
    %v353 = vld [vmem:[#allocation8 + $0x34] sm:$0xf]
    %v354 = vld [vmem:[#allocation8 + $0x38] sm:$0xf]
    %v355 = vld [vmem:[#allocation8 + $0x3c] sm:$0xf]
    %v356 = vld [vmem:[%s6] sm:$0x1]
    %v358 = vperm.slane %v356, 0
    %v376 = vunpack.c.l.b16 %v340
    %v377 = vunpack.c.l.b16 %v341
    %v378 = vunpack.c.l.b16 %v342
    %v379 = vunpack.c.l.b16 %v343
    %v380 = vunpack.c.l.b16 %v344
    %v381 = vunpack.c.l.b16 %v345
    %v382 = vunpack.c.l.b16 %v346
    %v383 = vunpack.c.l.b16 %v347
    %v384 = vunpack.c.l.b16 %v348
    %v385 = vunpack.c.l.b16 %v349
    %v386 = vunpack.c.l.b16 %v350
    %v387 = vunpack.c.l.b16 %v351
    %v388 = vunpack.c.l.b16 %v352
    %v389 = vunpack.c.l.b16 %v353
    %v390 = vunpack.c.l.b16 %v354
    %v391 = vunpack.c.l.b16 %v355
    %v392 = vpack.c.b16 %v377, %v376
    %v393 = vpack.c.b16 %v379, %v378
    %v394 = vpack.c.b16 %v381, %v380
    %v395 = vpack.c.b16 %v383, %v382
    %v396 = vpack.c.b16 %v385, %v384
    %v397 = vpack.c.b16 %v387, %v386
    %v398 = vpack.c.b16 %v389, %v388
    %v399 = vpack.c.b16 %v391, %v390
    %408 = vmatpush.bf16.msra.mxu0 %v399
    %409 = vmatpush.bf16.msra.mxu0 %v398
    %410 = vmatpush.bf16.msra.mxu0 %v397
    %411 = vmatpush.bf16.msra.mxu0 %v396
    %412 = vmatpush.bf16.msra.mxu0 %v395
    %413 = vmatpush.bf16.msra.mxu0 %v394
    %414 = vmatpush.bf16.msra.mxu0 %v393
    %415 = vmatpush.bf16.msra.mxu0 %v392
    %416 = vmatmul.bf16.gmra.mxu0 %v336
    %v417 = vpop.f32.mrf.mxu0
    %v418 = vadd.f32 %v358, %v417
    %v419 = vpop.f32.mrf.mxu0
    %v420 = vadd.f32 %v358, %v419
    %421 = vmatmul.bf16.gmra.mxu0 %v337
    %v422 = vpop.f32.mrf.mxu0
    %v423 = vadd.f32 %v358, %v422
    %v424 = vpop.f32.mrf.mxu0
    %v425 = vadd.f32 %v358, %v424
    %426 = vmatmul.bf16.gmra.mxu0 %v338
    %v427 = vpop.f32.mrf.mxu0
    %v428 = vadd.f32 %v358, %v427
    %v429 = vpop.f32.mrf.mxu0
    %v430 = vadd.f32 %v358, %v429
    %431 = vmatmul.bf16.gmra.mxu0 %v339
    %v432 = vpop.f32.mrf.mxu0
    %v433 = vadd.f32 %v358, %v432
    %v434 = vpop.f32.mrf.mxu0
    %v435 = vadd.f32 %v358, %v434
    %436 = vdwg.mxu0
    %437 = vst [vmem:[#allocation10] sm:$0xff] %v418
    %438 = vst [vmem:[#allocation10 + $0x8] sm:$0xff] %v420
    %439 = vst [vmem:[#allocation10 + $0x10] sm:$0xff] %v423
    %440 = vst [vmem:[#allocation10 + $0x18] sm:$0xff] %v425
    %441 = vst [vmem:[#allocation10 + $0x20] sm:$0xff] %v428
    %442 = vst [vmem:[#allocation10 + $0x28] sm:$0xff] %v430
    %443 = vst [vmem:[#allocation10 + $0x30] sm:$0xff] %v433
    %444 = vst [vmem:[#allocation10 + $0x38] sm:$0xff] %v435
    // Predicated region
    $region46: #{tpu_custom_call.1} parent=1 // pred_check
      _
    $region47: #{tpu_custom_call.1} parent=1 // pred_check_branch
      %446 = sbr.rel (0) target = $region49
    $region48: #{tpu_custom_call.1} parent=1 // pred_region
      %448 = vsyncadd [#allocation4], 0
      %s449 = sshll.u32 [#allocation10], 4
      %s450 = int_to_ptr.vmem [resolvable:$true] %s449
      %s451 = sshll.u32 %s7, 4
      %s452 = int_to_ptr.hbm [resolvable:$true] %s451
      %457 = dma.vmem_to_hbm [thread:$0]  %s450, 1024, %s452, [#allocation4], 128, 128, 8
    $region49: #{tpu_custom_call.1} parent=1 // pred_fallthru
      _
    // Predicated region
    $region50: #{tpu_custom_call.1} parent=1 // pred_check
      _
    $region51: #{tpu_custom_call.1} parent=1 // pred_check_branch
      %459 = sbr.rel (0) target = $region53
    $region52: #{tpu_custom_call.1} parent=1 // pred_region
      %461 = dma.done [#allocation4], 1024
    $region53: #{tpu_custom_call.1} parent=1 // pred_fallthru
      _
    %462 = vsyncpa [#allocation3], 1
    %463 = vsyncpa [#allocation6], 1
    %464 = vsyncpa [#allocation9], 1
    %465 = vsyncpa [#allocation4], 1

// kernel: tpu_custom_call.1
$region0: #{tpu_custom_call.1}
  #allocation0 [shape = 'u32[]', space=smem, size = 0x4, offset = 0x4, fixed_abs, tag = 'smem constant byte address 0x4 - core index']
  #allocation1 [shape = 'u32[72,128]{1,0:T(1,128)}', space=vmem, size = 0x9000, scoped, tag = 'internal scratch']
  %s0 = inlined_call_operand.hbm [shape: bf16[64,128], index: 0, kind: input, shape index: {}]
  %s1 = inlined_call_operand.hbm [shape: bf16[128,128], index: 1, kind: input, shape index: {}]
  %s2 = inlined_call_operand.vmem [shape: f32[1,128], index: 2, kind: input, shape index: {}]
  %s3 = inlined_call_operand.hbm [shape: bf16[128,128], index: 3, kind: input, shape index: {}]
  %s4 = inlined_call_operand.vmem [shape: f32[1,128], index: 4, kind: input, shape index: {}]
  %s5 = inlined_call_operand.hbm [shape: bf16[128,128], index: 5, kind: input, shape index: {}]
  %s6 = inlined_call_operand.vmem [shape: f32[1,128], index: 6, kind: input, shape index: {}]
  %s7 = inlined_call_operand.hbm [shape: f32[64,128], index: 7, kind: output, shape index: {}]
  %s8 = sld [smem:[#allocation0]]
  $region54: #{tpu_custom_call.1} parent=0
    _
  %s10 = ssub.s32 1, %s8
  %s11 = scalar_select 0, %s10, %s8
  $region1: #{tpu_custom_call.1} parent=0
    #allocation2 [shape = 'u8[16384]{0}', space=vmem, size = 0x4000, scoped, tag = 'input window, operand 0, single buffered']
    #allocation3 [shape = 's32[1]{0}', space=sflag, size = 0x4, scoped, tag = 'scoped memory for tpu_custom_call.1']
    #allocation4 [shape = 's32[1]{0}', space=sflag, size = 0x4, scoped, tag = 'scoped memory for tpu_custom_call.1']
    #allocation5 [shape = 'u8[32768]{0}', space=vmem, size = 0x8000, scoped, tag = 'input window, operand 1, single buffered']
    #allocation6 [shape = 's32[1]{0}', space=sflag, size = 0x4, scoped, tag = 'scoped memory for tpu_custom_call.1']
    #allocation7 [shape = 'u8[32768]{0}', space=vmem, size = 0x8000, scoped, tag = 'input window, operand 3, single buffered']
    #allocation8 [shape = 'u8[32768]{0}', space=vmem, size = 0x8000, scoped, tag = 'input window, operand 5, single buffered']
    #allocation9 [shape = 's32[1]{0}', space=sflag, size = 0x4, scoped, tag = 'scoped memory for tpu_custom_call.1']
    #allocation10 [shape = 'u8[32768]{0}', space=vmem, size = 0x8000, scoped, tag = 'output window, operand 0, single buffered']
    %12 = vsyncpa [#allocation3], 0
    %13 = vsyncpa [#allocation6], 0
    %14 = vsyncpa [#allocation9], 0
    %15 = vsyncpa [#allocation4], 0
    // Predicated region
    $region2: #{tpu_custom_call.1} parent=1 // pred_check
      _
    $region3: #{tpu_custom_call.1} parent=1 // pred_check_branch
      %17 = sbr.rel (0) target = $region5
    $region4: #{tpu_custom_call.1} parent=1 // pred_region
      %19 = vsyncadd [#allocation3], 0
      %s20 = sshll.u32 %s0, 4
      %s21 = int_to_ptr.hbm [resolvable:$true] %s20
      %s22 = sshll.u32 [#allocation2], 4
      %s23 = int_to_ptr.vmem [resolvable:$true] %s22
      %28 = dma.hbm_to_vmem [thread:$0]  %s21, 512, %s23, [#allocation3], 64, 64, 4
    $region5: #{tpu_custom_call.1} parent=1 // pred_fallthru
      _
    // Predicated region
    $region6: #{tpu_custom_call.1} parent=1 // pred_check
      _
    $region7: #{tpu_custom_call.1} parent=1 // pred_check_branch
      %30 = sbr.rel (0) target = $region9
    $region8: #{tpu_custom_call.1} parent=1 // pred_region
      %32 = vsyncadd [#allocation6], 0
      %s33 = sshll.u32 %s1, 4
      %s34 = int_to_ptr.hbm [resolvable:$true] %s33
      %s35 = sshll.u32 [#allocation5], 4
      %s36 = int_to_ptr.vmem [resolvable:$true] %s35
      %41 = dma.hbm_to_vmem [thread:$0]  %s34, 1024, %s36, [#allocation6], 64, 64, 4
    $region9: #{tpu_custom_call.1} parent=1 // pred_fallthru
      _
    // Predicated region
    $region10: #{tpu_custom_call.1} parent=1 // pred_check
      _
    $region11: #{tpu_custom_call.1} parent=1 // pred_check_branch
      %43 = sbr.rel (0) target = $region13
    $region12: #{tpu_custom_call.1} parent=1 // pred_region
      _
    $region13: #{tpu_custom_call.1} parent=1 // pred_fallthru
      _
    // Predicated region
    $region14: #{tpu_custom_call.1} parent=1 // pred_check
      _
    $region15: #{tpu_custom_call.1} parent=1 // pred_check_branch
      %45 = sbr.rel (0) target = $region17
    $region16: #{tpu_custom_call.1} parent=1 // pred_region
      %47 = vsyncadd [#allocation6], 0
      %s48 = sshll.u32 %s3, 4
      %s49 = int_to_ptr.hbm [resolvable:$true] %s48
      %s50 = sshll.u32 [#allocation7], 4
      %s51 = int_to_ptr.vmem [resolvable:$true] %s50
      %56 = dma.hbm_to_vmem [thread:$0]  %s49, 1024, %s51, [#allocation6], 64, 64, 4
    $region17: #{tpu_custom_call.1} parent=1 // pred_fallthru
      _
    // Predicated region
    $region18: #{tpu_custom_call.1} parent=1 // pred_check
      _
    $region19: #{tpu_custom_call.1} parent=1 // pred_check_branch
      %58 = sbr.rel (0) target = $region21
    $region20: #{tpu_custom_call.1} parent=1 // pred_region
      _
    $region21: #{tpu_custom_call.1} parent=1 // pred_fallthru
      _
    // Predicated region
    $region22: #{tpu_custom_call.1} parent=1 // pred_check
      _
    $region23: #{tpu_custom_call.1} parent=1 // pred_check_branch
      %60 = sbr.rel (0) target = $region25
    $region24: #{tpu_custom_call.1} parent=1 // pred_region
      %62 = vsyncadd [#allocation9], 0
      %s63 = sshll.u32 %s5, 4
      %s64 = int_to_ptr.hbm [resolvable:$true] %s63
      %s65 = sshll.u32 [#allocation8], 4
      %s66 = int_to_ptr.vmem [resolvable:$true] %s65
      %71 = dma.hbm_to_vmem [thread:$0]  %s64, 1024, %s66, [#allocation9], 64, 64, 4
    $region25: #{tpu_custom_call.1} parent=1 // pred_fallthru
      _
    // Predicated region
    $region26: #{tpu_custom_call.1} parent=1 // pred_check
      _
    $region27: #{tpu_custom_call.1} parent=1 // pred_check_branch
      %73 = sbr.rel (0) target = $region29
    $region28: #{tpu_custom_call.1} parent=1 // pred_region
      _
    $region29: #{tpu_custom_call.1} parent=1 // pred_fallthru
      _
    // Predicated region
    $region30: #{tpu_custom_call.1} parent=1 // pred_check
      _
    $region31: #{tpu_custom_call.1} parent=1 // pred_check_branch
      %75 = sbr.rel (0) target = $region33
    $region32: #{tpu_custom_call.1} parent=1 // pred_region
      %77 = dma.done [#allocation3], 512
    $region33: #{tpu_custom_call.1} parent=1 // pred_fallthru
      _
    // Predicated region
    $region34: #{tpu_custom_call.1} parent=1 // pred_check
      _
    $region35: #{tpu_custom_call.1} parent=1 // pred_check_branch
      %79 = sbr.rel (0) target = $region37
    $region36: #{tpu_custom_call.1} parent=1 // pred_region
      %81 = dma.done [#allocation6], 1024
    $region37: #{tpu_custom_call.1} parent=1 // pred_fallthru
      _
    // Predicated region
    $region38: #{tpu_custom_call.1} parent=1 // pred_check
      _
    $region39: #{tpu_custom_call.1} parent=1 // pred_check_branch
      %83 = sbr.rel (0) target = $region41
    $region40: #{tpu_custom_call.1} parent=1 // pred_region
      %85 = dma.done [#allocation6], 1024
    $region41: #{tpu_custom_call.1} parent=1 // pred_fallthru
      _
    // Predicated region
    $region42: #{tpu_custom_call.1} parent=1 // pred_check
      _
    $region43: #{tpu_custom_call.1} parent=1 // pred_check_branch
      %87 = sbr.rel (0) target = $region45
    $region44: #{tpu_custom_call.1} parent=1 // pred_region
      %89 = dma.done [#allocation9], 1024
    $region45: #{tpu_custom_call.1} parent=1 // pred_fallthru
      _
    %v90 = vld [vmem:[#allocation2] sm:$0xf]
    %v91 = vld [vmem:[#allocation2 + $0x4] sm:$0xf]
    %v92 = vld [vmem:[#allocation2 + $0x8] sm:$0xf]
    %v93 = vld [vmem:[#allocation2 + $0xc] sm:$0xf]
    %v94 = vld [vmem:[#allocation2 + $0x10] sm:$0xf]
    %v95 = vld [vmem:[#allocation2 + $0x14] sm:$0xf]
    %v96 = vld [vmem:[#allocation2 + $0x18] sm:$0xf]
    %v97 = vld [vmem:[#allocation2 + $0x1c] sm:$0xf]
    %v98 = vld [vmem:[#allocation5] sm:$0xf]
    %v99 = vld [vmem:[#allocation5 + $0x4] sm:$0xf]
    %v100 = vld [vmem:[#allocation5 + $0x8] sm:$0xf]
    %v101 = vld [vmem:[#allocation5 + $0xc] sm:$0xf]
    %v102 = vld [vmem:[#allocation5 + $0x10] sm:$0xf]
    %v103 = vld [vmem:[#allocation5 + $0x14] sm:$0xf]
    %v104 = vld [vmem:[#allocation5 + $0x18] sm:$0xf]
    %v105 = vld [vmem:[#allocation5 + $0x1c] sm:$0xf]
    %v106 = vld [vmem:[#allocation5 + $0x20] sm:$0xf]
    %v107 = vld [vmem:[#allocation5 + $0x24] sm:$0xf]
    %v108 = vld [vmem:[#allocation5 + $0x28] sm:$0xf]
    %v109 = vld [vmem:[#allocation5 + $0x2c] sm:$0xf]
    %v110 = vld [vmem:[#allocation5 + $0x30] sm:$0xf]
    %v111 = vld [vmem:[#allocation5 + $0x34] sm:$0xf]
    %v112 = vld [vmem:[#allocation5 + $0x38] sm:$0xf]
    %v113 = vld [vmem:[#allocation5 + $0x3c] sm:$0xf]
    %v114 = vld [vmem:[%s2] sm:$0x1]
    %v116 = vperm.slane %v114, 0
    %v126 = vunpack.c.l.b16 %v90
    %v127 = vunpack.c.l.b16 %v91
    %v128 = vunpack.c.l.b16 %v92
    %v129 = vunpack.c.l.b16 %v93
    %v130 = vunpack.c.l.b16 %v94
    %v131 = vunpack.c.l.b16 %v95
    %v132 = vunpack.c.l.b16 %v96
    %v133 = vunpack.c.l.b16 %v97
    %v134 = vpack.c.b16 %v127, %v126
    %v135 = vpack.c.b16 %v129, %v128
    %v136 = vpack.c.b16 %v131, %v130
    %v137 = vpack.c.b16 %v133, %v132
    %v158 = vunpack.c.l.b16 %v98
    %v159 = vunpack.c.l.b16 %v99
    %v160 = vunpack.c.l.b16 %v100
    %v161 = vunpack.c.l.b16 %v101
    %v162 = vunpack.c.l.b16 %v102
    %v163 = vunpack.c.l.b16 %v103
    %v164 = vunpack.c.l.b16 %v104
    %v165 = vunpack.c.l.b16 %v105
    %v166 = vunpack.c.l.b16 %v106
    %v167 = vunpack.c.l.b16 %v107
    %v168 = vunpack.c.l.b16 %v108
    %v169 = vunpack.c.l.b16 %v109
    %v170 = vunpack.c.l.b16 %v110
    %v171 = vunpack.c.l.b16 %v111
    %v172 = vunpack.c.l.b16 %v112
    %v173 = vunpack.c.l.b16 %v113
    %v174 = vpack.c.b16 %v159, %v158
    %v175 = vpack.c.b16 %v161, %v160
    %v176 = vpack.c.b16 %v163, %v162
    %v177 = vpack.c.b16 %v165, %v164
    %v178 = vpack.c.b16 %v167, %v166
    %v179 = vpack.c.b16 %v169, %v168
    %v180 = vpack.c.b16 %v171, %v170
    %v181 = vpack.c.b16 %v173, %v172
    %190 = vmatpush.bf16.msra.mxu0 %v181
    %191 = vmatpush.bf16.msra.mxu0 %v180
    %192 = vmatpush.bf16.msra.mxu0 %v179
    %193 = vmatpush.bf16.msra.mxu0 %v178
    %194 = vmatpush.bf16.msra.mxu0 %v177
    %195 = vmatpush.bf16.msra.mxu0 %v176
    %196 = vmatpush.bf16.msra.mxu0 %v175
    %197 = vmatpush.bf16.msra.mxu0 %v174
    %198 = vmatmul.bf16.gmra.mxu0 %v134
    %v199 = vpop.f32.mrf.mxu0
    %v200 = vadd.f32 %v116, %v199
    %v201 = vpop.f32.mrf.mxu0
    %v202 = vadd.f32 %v116, %v201
    %203 = vmatmul.bf16.gmra.mxu0 %v135
    %v204 = vpop.f32.mrf.mxu0
    %v205 = vadd.f32 %v116, %v204
    %v206 = vpop.f32.mrf.mxu0
    %v207 = vadd.f32 %v116, %v206
    %208 = vmatmul.bf16.gmra.mxu0 %v136
    %v209 = vpop.f32.mrf.mxu0
    %v210 = vadd.f32 %v116, %v209
    %v211 = vpop.f32.mrf.mxu0
    %v212 = vadd.f32 %v116, %v211
    %213 = vmatmul.bf16.gmra.mxu0 %v137
    %v214 = vpop.f32.mrf.mxu0
    %v215 = vadd.f32 %v116, %v214
    %v216 = vpop.f32.mrf.mxu0
    %v217 = vadd.f32 %v116, %v216
    %218 = vdwg.mxu0
    %v219 = vmax.f32 %v200, 0.0
    %v220 = vmax.f32 %v202, 0.0
    %v221 = vmax.f32 %v205, 0.0
    %v222 = vmax.f32 %v207, 0.0
    %v223 = vmax.f32 %v210, 0.0
    %v224 = vmax.f32 %v212, 0.0
    %v225 = vmax.f32 %v215, 0.0
    %v226 = vmax.f32 %v217, 0.0
    %v227 = vpack.c.bf16 %v220, %v219
    %v228 = vpack.c.bf16 %v222, %v221
    %v229 = vpack.c.bf16 %v224, %v223
    %v230 = vpack.c.bf16 %v226, %v225
    %v231 = vld [vmem:[#allocation7] sm:$0xf]
    %v232 = vld [vmem:[#allocation7 + $0x4] sm:$0xf]
    %v233 = vld [vmem:[#allocation7 + $0x8] sm:$0xf]
    %v234 = vld [vmem:[#allocation7 + $0xc] sm:$0xf]
    %v235 = vld [vmem:[#allocation7 + $0x10] sm:$0xf]
    %v236 = vld [vmem:[#allocation7 + $0x14] sm:$0xf]
    %v237 = vld [vmem:[#allocation7 + $0x18] sm:$0xf]
    %v238 = vld [vmem:[#allocation7 + $0x1c] sm:$0xf]
    %v239 = vld [vmem:[#allocation7 + $0x20] sm:$0xf]
    %v240 = vld [vmem:[#allocation7 + $0x24] sm:$0xf]
    %v241 = vld [vmem:[#allocation7 + $0x28] sm:$0xf]
    %v242 = vld [vmem:[#allocation7 + $0x2c] sm:$0xf]
    %v243 = vld [vmem:[#allocation7 + $0x30] sm:$0xf]
    %v244 = vld [vmem:[#allocation7 + $0x34] sm:$0xf]
    %v245 = vld [vmem:[#allocation7 + $0x38] sm:$0xf]
    %v246 = vld [vmem:[#allocation7 + $0x3c] sm:$0xf]
    %v247 = vld [vmem:[%s4] sm:$0x1]
    %v249 = vperm.slane %v247, 0
    %v267 = vunpack.c.l.b16 %v231
    %v268 = vunpack.c.l.b16 %v232
    %v269 = vunpack.c.l.b16 %v233
    %v270 = vunpack.c.l.b16 %v234
    %v271 = vunpack.c.l.b16 %v235
    %v272 = vunpack.c.l.b16 %v236
    %v273 = vunpack.c.l.b16 %v237
    %v274 = vunpack.c.l.b16 %v238
    %v275 = vunpack.c.l.b16 %v239
    %v276 = vunpack.c.l.b16 %v240
    %v277 = vunpack.c.l.b16 %v241
    %v278 = vunpack.c.l.b16 %v242
    %v279 = vunpack.c.l.b16 %v243
    %v280 = vunpack.c.l.b16 %v244
    %v281 = vunpack.c.l.b16 %v245
    %v282 = vunpack.c.l.b16 %v246
    %v283 = vpack.c.b16 %v268, %v267
    %v284 = vpack.c.b16 %v270, %v269
    %v285 = vpack.c.b16 %v272, %v271
    %v286 = vpack.c.b16 %v274, %v273
    %v287 = vpack.c.b16 %v276, %v275
    %v288 = vpack.c.b16 %v278, %v277
    %v289 = vpack.c.b16 %v280, %v279
    %v290 = vpack.c.b16 %v282, %v281
    %299 = vmatpush.bf16.msra.mxu0 %v290
    %300 = vmatpush.bf16.msra.mxu0 %v289
    %301 = vmatpush.bf16.msra.mxu0 %v288
    %302 = vmatpush.bf16.msra.mxu0 %v287
    %303 = vmatpush.bf16.msra.mxu0 %v286
    %304 = vmatpush.bf16.msra.mxu0 %v285
    %305 = vmatpush.bf16.msra.mxu0 %v284
    %306 = vmatpush.bf16.msra.mxu0 %v283
    %307 = vmatmul.bf16.gmra.mxu0 %v227
    %v308 = vpop.f32.mrf.mxu0
    %v309 = vadd.f32 %v249, %v308
    %v310 = vpop.f32.mrf.mxu0
    %v311 = vadd.f32 %v249, %v310
    %312 = vmatmul.bf16.gmra.mxu0 %v228
    %v313 = vpop.f32.mrf.mxu0
    %v314 = vadd.f32 %v249, %v313
    %v315 = vpop.f32.mrf.mxu0
    %v316 = vadd.f32 %v249, %v315
    %317 = vmatmul.bf16.gmra.mxu0 %v229
    %v318 = vpop.f32.mrf.mxu0
    %v319 = vadd.f32 %v249, %v318
    %v320 = vpop.f32.mrf.mxu0
    %v321 = vadd.f32 %v249, %v320
    %322 = vmatmul.bf16.gmra.mxu0 %v230
    %v323 = vpop.f32.mrf.mxu0
    %v324 = vadd.f32 %v249, %v323
    %v325 = vpop.f32.mrf.mxu0
    %v326 = vadd.f32 %v249, %v325
    %327 = vdwg.mxu0
    %v328 = vmax.f32 %v309, 0.0
    %v329 = vmax.f32 %v311, 0.0
    %v330 = vmax.f32 %v314, 0.0
    %v331 = vmax.f32 %v316, 0.0
    %v332 = vmax.f32 %v319, 0.0
    %v333 = vmax.f32 %v321, 0.0
    %v334 = vmax.f32 %v324, 0.0
    %v335 = vmax.f32 %v326, 0.0
    %v336 = vpack.c.bf16 %v329, %v328
    %v337 = vpack.c.bf16 %v331, %v330
    %v338 = vpack.c.bf16 %v333, %v332
    %v339 = vpack.c.bf16 %v335, %v334
    %v340 = vld [vmem:[#allocation8] sm:$0xf]
    %v341 = vld [vmem:[#allocation8 + $0x4] sm:$0xf]
    %v342 = vld [vmem:[#allocation8 + $0x8] sm:$0xf]
    %v343 = vld [vmem:[#allocation8 + $0xc] sm:$0xf]
    %v344 = vld [vmem:[#allocation8 + $0x10] sm:$0xf]
    %v345 = vld [vmem:[#allocation8 + $0x14] sm:$0xf]
    %v346 = vld [vmem:[#allocation8 + $0x18] sm:$0xf]
    %v347 = vld [vmem:[#allocation8 + $0x1c] sm:$0xf]
    %v348 = vld [vmem:[#allocation8 + $0x20] sm:$0xf]
    %v349 = vld [vmem:[#allocation8 + $0x24] sm:$0xf]
    %v350 = vld [vmem:[#allocation8 + $0x28] sm:$0xf]
    %v351 = vld [vmem:[#allocation8 + $0x2c] sm:$0xf]
    %v352 = vld [vmem:[#allocation8 + $0x30] sm:$0xf]
    %v353 = vld [vmem:[#allocation8 + $0x34] sm:$0xf]
    %v354 = vld [vmem:[#allocation8 + $0x38] sm:$0xf]
    %v355 = vld [vmem:[#allocation8 + $0x3c] sm:$0xf]
    %v356 = vld [vmem:[%s6] sm:$0x1]
    %v358 = vperm.slane %v356, 0
    %v376 = vunpack.c.l.b16 %v340
    %v377 = vunpack.c.l.b16 %v341
    %v378 = vunpack.c.l.b16 %v342
    %v379 = vunpack.c.l.b16 %v343
    %v380 = vunpack.c.l.b16 %v344
    %v381 = vunpack.c.l.b16 %v345
    %v382 = vunpack.c.l.b16 %v346
    %v383 = vunpack.c.l.b16 %v347
    %v384 = vunpack.c.l.b16 %v348
    %v385 = vunpack.c.l.b16 %v349
    %v386 = vunpack.c.l.b16 %v350
    %v387 = vunpack.c.l.b16 %v351
    %v388 = vunpack.c.l.b16 %v352
    %v389 = vunpack.c.l.b16 %v353
    %v390 = vunpack.c.l.b16 %v354
    %v391 = vunpack.c.l.b16 %v355
    %v392 = vpack.c.b16 %v377, %v376
    %v393 = vpack.c.b16 %v379, %v378
    %v394 = vpack.c.b16 %v381, %v380
    %v395 = vpack.c.b16 %v383, %v382
    %v396 = vpack.c.b16 %v385, %v384
    %v397 = vpack.c.b16 %v387, %v386
    %v398 = vpack.c.b16 %v389, %v388
    %v399 = vpack.c.b16 %v391, %v390
    %408 = vmatpush.bf16.msra.mxu0 %v399
    %409 = vmatpush.bf16.msra.mxu0 %v398
    %410 = vmatpush.bf16.msra.mxu0 %v397
    %411 = vmatpush.bf16.msra.mxu0 %v396
    %412 = vmatpush.bf16.msra.mxu0 %v395
    %413 = vmatpush.bf16.msra.mxu0 %v394
    %414 = vmatpush.bf16.msra.mxu0 %v393
    %415 = vmatpush.bf16.msra.mxu0 %v392
    %416 = vmatmul.bf16.gmra.mxu0 %v336
    %v417 = vpop.f32.mrf.mxu0
    %v418 = vadd.f32 %v358, %v417
    %v419 = vpop.f32.mrf.mxu0
    %v420 = vadd.f32 %v358, %v419
    %421 = vmatmul.bf16.gmra.mxu0 %v337
    %v422 = vpop.f32.mrf.mxu0
    %v423 = vadd.f32 %v358, %v422
    %v424 = vpop.f32.mrf.mxu0
    %v425 = vadd.f32 %v358, %v424
    %426 = vmatmul.bf16.gmra.mxu0 %v338
    %v427 = vpop.f32.mrf.mxu0
    %v428 = vadd.f32 %v358, %v427
    %v429 = vpop.f32.mrf.mxu0
    %v430 = vadd.f32 %v358, %v429
    %431 = vmatmul.bf16.gmra.mxu0 %v339
    %v432 = vpop.f32.mrf.mxu0
    %v433 = vadd.f32 %v358, %v432
    %v434 = vpop.f32.mrf.mxu0
    %v435 = vadd.f32 %v358, %v434
    %436 = vdwg.mxu0
    %437 = vst [vmem:[#allocation10] sm:$0xff] %v418
    %438 = vst [vmem:[#allocation10 + $0x8] sm:$0xff] %v420
    %439 = vst [vmem:[#allocation10 + $0x10] sm:$0xff] %v423
    %440 = vst [vmem:[#allocation10 + $0x18] sm:$0xff] %v425
    %441 = vst [vmem:[#allocation10 + $0x20] sm:$0xff] %v428
    %442 = vst [vmem:[#allocation10 + $0x28] sm:$0xff] %v430
    %443 = vst [vmem:[#allocation10 + $0x30] sm:$0xff] %v433
    %444 = vst [vmem:[#allocation10 + $0x38] sm:$0xff] %v435
    // Predicated region
    $region46: #{tpu_custom_call.1} parent=1 // pred_check
      _
    $region47: #{tpu_custom_call.1} parent=1 // pred_check_branch
      %446 = sbr.rel (0) target = $region49
    $region48: #{tpu_custom_call.1} parent=1 // pred_region
      %448 = vsyncadd [#allocation4], 0
      %s449 = sshll.u32 [#allocation10], 4
      %s450 = int_to_ptr.vmem [resolvable:$true] %s449
      %s451 = sshll.u32 %s7, 4
      %s452 = int_to_ptr.hbm [resolvable:$true] %s451
      %457 = dma.vmem_to_hbm [thread:$0]  %s450, 1024, %s452, [#allocation4], 128, 128, 8
    $region49: #{tpu_custom_call.1} parent=1 // pred_fallthru
      _
    // Predicated region
    $region50: #{tpu_custom_call.1} parent=1 // pred_check
      _
    $region51: #{tpu_custom_call.1} parent=1 // pred_check_branch
      %459 = sbr.rel (0) target = $region53
    $region52: #{tpu_custom_call.1} parent=1 // pred_region
      %461 = dma.done [#allocation4], 1024
    $region53: #{tpu_custom_call.1} parent=1 // pred_fallthru
      _
    %462 = vsyncpa [#allocation3], 1
    %463 = vsyncpa [#allocation6], 1
    %464 = vsyncpa [#allocation9], 1
    %465 = vsyncpa [#allocation4], 1

</llo_original>
